<compile_context>
chip_gen: v7x
topology: tpu7x:2x2x1
jax: 0.10.0
libtpu: 0.0.40
codegen_flags: <defaults>
</compile_context>

<pallas_src>
import jax
import jax.numpy as jnp
from jax.experimental import pallas as pl
from jax.experimental.pallas import tpu as pltpu


# ------------------------- Pallas kernel -------------------------

def _concat_kernel(l1_ref, l2_ref, o_ref):
    # l1_ref: (1, C1, T)   l2_ref: (1, C2, T)   o_ref: (1, C1+C2, T)
    c1 = l1_ref.shape[1]
    o_ref[:, :c1, :] = l1_ref[...]
    o_ref[:, c1:, :] = l2_ref[...]


# ------------------------- wrapper -------------------------

def _pick_spatial_tile(hw, max_tile=2048):
    """Largest multiple of 128 that divides hw (capped at max_tile); falls back
    to the full extent if hw is not 128-aligned (block == full dim is legal)."""
    if hw % 128 != 0:
        return hw
    best = 128
    t = 128
    while t <= min(hw, max_tile):
        if hw % t == 0:
            best = t
        t += 128
    return best


def concatenate_channels(l1, l2):
    """Equivalent of torch.cat((l1, l2), dim=1) for NCHW tensors."""
    assert l1.ndim == 4 and l2.ndim == 4
    n, c1, h, w = l1.shape
    n2, c2, h2, w2 = l2.shape
    assert (n, h, w) == (n2, h2, w2), "batch/spatial dims must match for dim-1 concat"
    assert l1.dtype == l2.dtype
    hw = h * w
    t = _pick_spatial_tile(hw)
    grid = (n, hw // t)

    a = l1.reshape(n, c1, hw)      # contiguous NCHW -> free reshape (no copy)
    b = l2.reshape(n, c2, hw)

    bytes_moved = 2 * (a.size + b.size) * jnp.dtype(l1.dtype).itemsize  # read + write

    out = pl.pallas_call(
        _concat_kernel,
        out_shape=jax.ShapeDtypeStruct((n, c1 + c2, hw), l1.dtype),
        grid=grid,
        in_specs=[
            pl.BlockSpec((1, c1, t), lambda i, j: (i, 0, j)),
            pl.BlockSpec((1, c2, t), lambda i, j: (i, 0, j)),
        ],
        out_specs=pl.BlockSpec((1, c1 + c2, t), lambda i, j: (i, 0, j)),
        compiler_params=pltpu.CompilerParams(
            dimension_semantics=("parallel", "parallel")),
        cost_estimate=pl.CostEstimate(
            flops=0, transcendentals=0, bytes_accessed=bytes_moved),
    )(a, b)
    return out.reshape(n, c1 + c2, h, w)


# ------------------------- main -------------------------

if __name__ == "__main__":
    key = jax.random.PRNGKey(0)
    k1, k2 = jax.random.split(key)

    # Small UNet-skip-like shapes: same batch/spatial, different channel counts.
    l1 = jax.random.normal(k1, (2, 4, 16, 16), jnp.float32)
    l2 = jax.random.normal(k2, (2, 12, 16, 16), jnp.float32)

    out = jax.block_until_ready(concatenate_channels(l1, l2))
    ref = jnp.concatenate((l1, l2), axis=1)

    assert out.shape == (2, 16, 16, 16)
    assert jnp.array_equal(out, ref)
    print("KERNEL_OK")
</pallas_src>

<mosaic_0001>
module attributes {stable_mosaic.version = 11 : i64} {
  func.func @_concat_kernel(%arg0: i32, %arg1: i32, %arg2: memref<1x4x256xf32, #tpu.memory_space<vmem>>, %arg3: memref<1x12x256xf32, #tpu.memory_space<vmem>>, %arg4: memref<1x16x256xf32, #tpu.memory_space<vmem>>) attributes {dimension_semantics = [#tpu.dimension_semantics<parallel>, #tpu.dimension_semantics<parallel>], iteration_bounds = array<i64: 2, 1>, scalar_prefetch = 0 : i64, scratch_operands = 0 : i64, tpu.core_type = #tpu.core_type<tc>, window_params = [{transform_indices = @transform_0, window_bounds = array<i64: 1, 4, 256>}, {transform_indices = @transform_1, window_bounds = array<i64: 1, 12, 256>}, {transform_indices = @transform_2, window_bounds = array<i64: 1, 16, 256>}]} {
    %c0 = arith.constant 0 : index
    %c0_0 = arith.constant 0 : index
    %c0_1 = arith.constant 0 : index
    %0 = vector.load %arg2[%c0, %c0_0, %c0_1] : memref<1x4x256xf32, #tpu.memory_space<vmem>>, vector<1x4x256xf32>
    %c0_2 = arith.constant 0 : index
    %c0_3 = arith.constant 0 : index
    %c0_4 = arith.constant 0 : index
    %1 = vector.load %arg4[%c0_2, %c0_3, %c0_4] : memref<1x16x256xf32, #tpu.memory_space<vmem>>, vector<1x4x256xf32>
    tpu.vector_store %arg4[%c0_2, %c0_3, %c0_4], %0 {strides = array<i32>} : memref<1x16x256xf32, #tpu.memory_space<vmem>>, vector<1x4x256xf32>,
    %c0_5 = arith.constant 0 : index
    %c0_6 = arith.constant 0 : index
    %c0_7 = arith.constant 0 : index
    %2 = vector.load %arg3[%c0_5, %c0_6, %c0_7] : memref<1x12x256xf32, #tpu.memory_space<vmem>>, vector<1x12x256xf32>
    %c0_8 = arith.constant 0 : index
    %c4 = arith.constant 4 : index
    %c0_9 = arith.constant 0 : index
    %3 = vector.load %arg4[%c0_8, %c4, %c0_9] : memref<1x16x256xf32, #tpu.memory_space<vmem>>, vector<1x12x256xf32>
    tpu.vector_store %arg4[%c0_8, %c4, %c0_9], %2 {strides = array<i32>} : memref<1x16x256xf32, #tpu.memory_space<vmem>>, vector<1x12x256xf32>,
    return
  }
  func.func @transform_0(%arg0: i32, %arg1: i32) -> (i32, i32, i32) {
    %c0_i32 = arith.constant 0 : i32
    %c0_i32_0 = arith.constant 0 : i32
    return %arg0, %c0_i32, %arg1 : i32, i32, i32
  }
  func.func @transform_1(%arg0: i32, %arg1: i32) -> (i32, i32, i32) {
    %c0_i32 = arith.constant 0 : i32
    %c0_i32_0 = arith.constant 0 : i32
    return %arg0, %c0_i32, %arg1 : i32, i32, i32
  }
  func.func @transform_2(%arg0: i32, %arg1: i32) -> (i32, i32, i32) {
    %c0_i32 = arith.constant 0 : i32
    %c0_i32_0 = arith.constant 0 : i32
    return %arg0, %c0_i32, %arg1 : i32, i32, i32
  }
}

</mosaic_0001>

<llo_original>
// kernel: tpu_custom_call.1
$region0: #{tpu_custom_call.1}
  #allocation0 [shape = 'u32[]', space=smem, size = 0x4, offset = 0x4, fixed_abs, tag = 'smem constant byte address 0x4 - core index']
  #allocation1 [shape = 'u32[144,128]{1,0:T(1,128)}', space=vmem, size = 0x12000, scoped, tag = 'internal scratch']
  %s0 = inlined_call_operand.vmem [shape: f32[2,4,256], index: 0, kind: input, shape index: {}]
  %s1 = inlined_call_operand.vmem [shape: f32[2,12,256], index: 1, kind: input, shape index: {}]
  %s2 = inlined_call_operand.hbm [shape: f32[2,16,256], index: 2, kind: output, shape index: {}]
  %s3 = sld [smem:[#allocation0]]
  $region41: #{tpu_custom_call.1} parent=0
    _
  %s5 = ssub.s32 1, %s3
  %s6 = scalar_select 0, %s5, %s3
  $region1: #{tpu_custom_call.1} parent=0
    #allocation2 [shape = 'u8[32768]{0}', space=vmem, size = 0x8000, scoped, tag = 'output window, operand 0']
    #allocation3 [shape = 's32[2]{0}', space=sflag, size = 0x8, scoped, tag = 'scoped memory for tpu_custom_call.1']
    %7 = vsyncpa [#allocation3], 0
    %s8 = scalar_lea.sflag [#allocation3], 1
    %9 = vsyncpa %s8, 0
    loop: start=0, step=1, limit=4
    $region2: #{tpu_custom_call.1} parent=1 // loop_pre_header
      _
    $region3: #{tpu_custom_call.1} parent=1 // loop_header
      %s11 = sphi 0, %s15
      %p12 = scmp.ge.s32.totalorder %s11, 4
      %s18 = sphi 0, %s30
      %s19 = sphi 0, %s26
      %s20 = sphi 0, %s18
      %s21 = sphi 0, %s19
      %s22 = sphi 0, %s20
      %s23 = sphi 0, %s21
      %s35 = sphi 0, %s37
      %s38 = sphi 0, %s35
      %s39 = sphi 0, %s38
      %s55 = sphi 0, %s39
      %s63 = sphi 0, %s65
      %s66 = sphi 0, %s63
      %s67 = sphi 0, %s66
      %s83 = sphi 0, %s67
      %s91 = sphi 0, %s93
      %s94 = sphi 0, %s91
      %s95 = sphi 0, %s94
      %s111 = sphi 0, %s95
    $region4: #{tpu_custom_call.1} parent=1 // loop_header_branch
      %14 = sbr.rel (%p12) target = $region8
    $region5: #{tpu_custom_call.1} parent=1 // loop_body
      %s16 = ssub.s32 %s11, 1
      %s17 = ssub.s32 %s11, 2
      %s24 = sadd.s32 1, %s19
      %p25 = scmp.ge.s32.totalorder %s24, 1
      %s26 = scalar_select %p25, 0, %s24
      %s27 = sadd.s32 1, %s18
      %s28 = scalar_select %p25, %s27, %s18
      %p29 = scmp.ge.s32.totalorder %s28, 2
      %s30 = scalar_select %p29, 0, %s28
      %s31 = ssub.s32 %s18, %s30
      %s32 = ssub.s32 %s19, %s26
      %s33 = sor.u32 %s31, %s32
      %p34 = scmp.eq.s32.totalorder %s33, 0
      %s36 = sadd.s32 %s35, 1
      %s37 = scalar_select %p34, %s35, %s36
      %p40 = pneg %p34
      %p41 = scmp.eq.s32.totalorder %s11, 1
      %p42 = por %p40, %p41
      %p43 = scmp.ne.s32.totalorder %s35, %s38
      %p44 = scmp.eq.s32.totalorder %s11, 0
      %p45 = por %p43, %p44
      %p46 = scmp.ne.s32.totalorder %s35, %s38
      %p47 = scmp.eq.s32.totalorder %s16, 1
      %p48 = por %p46, %p47
      %p49 = scmp.ne.s32.totalorder %s38, %s39
      %p50 = scmp.eq.s32.totalorder %s16, 0
      %p51 = por %p49, %p50
      %p52 = scmp.ne.s32.totalorder %s38, %s39
      %p53 = scmp.eq.s32.totalorder %s17, 1
      %p54 = por %p52, %p53
      %p56 = scmp.ne.s32.totalorder %s39, %s55
      %p57 = scmp.eq.s32.totalorder %s17, 0
      %p58 = por %p56, %p57
      %s59 = ssub.s32 %s18, %s30
      %s60 = ssub.s32 %s19, %s26
      %s61 = sor.u32 %s59, %s60
      %p62 = scmp.eq.s32.totalorder %s61, 0
      %s64 = sadd.s32 %s63, 1
      %s65 = scalar_select %p62, %s63, %s64
      %p68 = pneg %p62
      %p69 = scmp.eq.s32.totalorder %s11, 1
      %p70 = por %p68, %p69
      %p71 = scmp.ne.s32.totalorder %s63, %s66
      %p72 = scmp.eq.s32.totalorder %s11, 0
      %p73 = por %p71, %p72
      %p74 = scmp.ne.s32.totalorder %s63, %s66
      %p75 = scmp.eq.s32.totalorder %s16, 1
      %p76 = por %p74, %p75
      %p77 = scmp.ne.s32.totalorder %s66, %s67
      %p78 = scmp.eq.s32.totalorder %s16, 0
      %p79 = por %p77, %p78
      %p80 = scmp.ne.s32.totalorder %s66, %s67
      %p81 = scmp.eq.s32.totalorder %s17, 1
      %p82 = por %p80, %p81
      %p84 = scmp.ne.s32.totalorder %s67, %s83
      %p85 = scmp.eq.s32.totalorder %s17, 0
      %p86 = por %p84, %p85
      %s87 = ssub.s32 %s18, %s30
      %s88 = ssub.s32 %s19, %s26
      %s89 = sor.u32 %s87, %s88
      %p90 = scmp.eq.s32.totalorder %s89, 0
      %s92 = sadd.s32 %s91, 1
      %s93 = scalar_select %p90, %s91, %s92
      %p96 = pneg %p90
      %p97 = scmp.eq.s32.totalorder %s11, 1
      %p98 = por %p96, %p97
      %p99 = scmp.ne.s32.totalorder %s91, %s94
      %p100 = scmp.eq.s32.totalorder %s11, 0
      %p101 = por %p99, %p100
      %p102 = scmp.ne.s32.totalorder %s91, %s94
      %p103 = scmp.eq.s32.totalorder %s16, 1
      %p104 = por %p102, %p103
      %p105 = scmp.ne.s32.totalorder %s94, %s95
      %p106 = scmp.eq.s32.totalorder %s16, 0
      %p107 = por %p105, %p106
      %p108 = scmp.ne.s32.totalorder %s94, %s95
      %p109 = scmp.eq.s32.totalorder %s17, 1
      %p110 = por %p108, %p109
      %p112 = scmp.ne.s32.totalorder %s95, %s111
      %p113 = scmp.eq.s32.totalorder %s17, 0
      %p114 = por %p112, %p113
      %p115 = scmp.le.s32.totalorder 1, %s11
      %p116 = scmp.lt.s32.totalorder %s11, 3
      %p117 = pnand %p115, %p116
      %p118 = pneg %p117
      // Predicated region
      $region9: #{tpu_custom_call.1} parent=5 // pred_check
        _
      $region10: #{tpu_custom_call.1} parent=5 // pred_check_branch
        %120 = sbr.rel (%p117) target = $region12
      $region11: #{tpu_custom_call.1} parent=5 // pred_region
        %s121 = ssub.s32 %s11, 1
      $region12: #{tpu_custom_call.1} parent=5 // pred_fallthru
        _
      %p122 = scmp.lt.s32.totalorder %s11, 2
      // Predicated region
      $region13: #{tpu_custom_call.1} parent=5 // pred_check
        %p123 = pneg %p122
      $region14: #{tpu_custom_call.1} parent=5 // pred_check_branch
        %125 = sbr.rel (%p123) target = $region16
      $region15: #{tpu_custom_call.1} parent=5 // pred_region
        // Predicated region
        $region17: #{tpu_custom_call.1} parent=15 // pred_check
          %p126 = pneg %p45
        $region18: #{tpu_custom_call.1} parent=15 // pred_check_branch
          %128 = sbr.rel (%p126) target = $region20
        $region19: #{tpu_custom_call.1} parent=15 // pred_region
          %s129 = smul.u32 2, %s19
          %p130 = scmp.lt.s32.totalorder %s18, 1
          %s131 = scalar_select %p130, %s18, 1
          %p132 = scmp.lt.s32.totalorder %s129, 1
          %s133 = scalar_select %p132, %s129, 1
          %s134 = smul.addr %s131, 2
          %s135 = sadd.s32 %s133, %s134
          %s136 = smul.addr %s135, 4
          %s137 = scalar_lea.vmem %s0, %s136
          %s138 = smul.u32 2, %s19
        $region20: #{tpu_custom_call.1} parent=15 // pred_fallthru
          _
        // Predicated region
        $region21: #{tpu_custom_call.1} parent=15 // pred_check
          %p139 = pneg %p73
        $region22: #{tpu_custom_call.1} parent=15 // pred_check_branch
          %141 = sbr.rel (%p139) target = $region24
        $region23: #{tpu_custom_call.1} parent=15 // pred_region
          %s142 = smul.u32 2, %s19
          %p143 = scmp.lt.s32.totalorder %s18, 1
          %s144 = scalar_select %p143, %s18, 1
          %p145 = scmp.lt.s32.totalorder %s142, 1
          %s146 = scalar_select %p145, %s142, 1
          %s147 = smul.addr %s144, 4
          %s148 = sadd.s32 %s146, %s147
          %s149 = smul.addr %s148, 8
          %s150 = scalar_lea.vmem %s1, %s149
          %s151 = smul.u32 2, %s19
        $region24: #{tpu_custom_call.1} parent=15 // pred_fallthru
          _
      $region16: #{tpu_custom_call.1} parent=5 // pred_fallthru
        _
      %p152 = scmp.le.s32.totalorder 1, %s11
      %p153 = scmp.lt.s32.totalorder %s11, 3
      %p154 = pnand %p152, %p153
      %p155 = pneg %p154
      // Predicated region
      $region25: #{tpu_custom_call.1} parent=5 // pred_check
        _
      $region26: #{tpu_custom_call.1} parent=5 // pred_check_branch
        %157 = sbr.rel (%p154) target = $region28
      $region27: #{tpu_custom_call.1} parent=5 // pred_region
        %s158 = ssub.s32 %s11, 1
        %s159 = smul.u32 2, %s21
        %p160 = scmp.lt.s32.totalorder %s20, 1
        %s161 = scalar_select %p160, %s20, 1
        %p162 = scmp.lt.s32.totalorder %s159, 1
        %s163 = scalar_select %p162, %s159, 1
        %s164 = smul.addr %s161, 2
        %s165 = sadd.s32 %s163, %s164
        %s166 = smul.addr %s165, 4
        %s167 = scalar_lea.vmem %s0, %s166
        %p168 = pneg %p51
        %p169 = pneg %p48
        %s170 = smul.u32 2, %s21
        %p171 = scmp.lt.s32.totalorder %s20, 1
        %s172 = scalar_select %p171, %s20, 1
        %p173 = scmp.lt.s32.totalorder %s170, 1
        %s174 = scalar_select %p173, %s170, 1
        %s175 = smul.addr %s172, 4
        %s176 = sadd.s32 %s174, %s175
        %s177 = smul.addr %s176, 8
        %s178 = scalar_lea.vmem %s1, %s177
        %p179 = pneg %p79
        %p180 = pneg %p76
        %p181 = pneg %p107
        %p182 = pneg %p104
        %s183 = sand.u32 %s94, 1
        %s184 = scalar_lea.sflag [#allocation3], %s183
        %s185 = sand.u32 %s94, 1
        %s186 = smul.addr %s185, 32
        %s187 = scalar_lea.vmem [#allocation2], %s186
        %s188 = smul.u32 2, %s21
        %p189 = scmp.lt.s32.totalorder %s20, 1
        %s190 = scalar_select %p189, %s20, 1
        %p191 = scmp.lt.s32.totalorder %s188, 1
        %s192 = scalar_select %p191, %s188, 1
        %s193 = smul.addr %s190, 2
        %s194 = sadd.s32 %s192, %s193
        %s195 = smul.addr %s194, 4
        %s196 = scalar_lea.vmem %s0, %s195
        %s197 = smul.u32 2, %s21
        %s198 = smul.u32 2, %s21
        %p199 = scmp.lt.s32.totalorder %s20, 1
        %s200 = scalar_select %p199, %s20, 1
        %p201 = scmp.lt.s32.totalorder %s198, 1
        %s202 = scalar_select %p201, %s198, 1
        %s203 = smul.addr %s200, 4
        %s204 = sadd.s32 %s202, %s203
        %s205 = smul.addr %s204, 8
        %s206 = scalar_lea.vmem %s1, %s205
        %s207 = smul.u32 2, %s21
        %s208 = smul.u32 2, %s21
        %v209 = vld [vmem:[%s196] sm:$0xff]
        %v211 = vcombine.high %v209, %v209
        %213 = vst [vmem:[%s187] sm:$0xf] %v209
        %214 = vst [vmem:[%s187 + $0x8] sm:$0xf] %v211
        %v215 = vld [vmem:[%s206] sm:$0xff]
        %v216 = vld [vmem:[%s206 + $0x8] sm:$0xff]
        %v217 = vld [vmem:[%s206 + $0x10] sm:$0xf]
        %v218 = vld [vmem:[%s206 + $0x18] sm:$0xf]
        %vm223 = vcmask 1043456
        %v224 = vrot.slane %v215, 4
        %v225 = vrot.slane %v216, 4
        %v226 = vrot.slane %v217, 4
        %v227 = vsel %vm223, %v224, %v226
        %v228 = vrot.slane %v218, 4
        %v229 = vsel %vm223, %v225, %v228
        %234 = vst [vmem:[%s187] sm:$0xf0] %v224
        %235 = vst [vmem:[%s187 + $0x8] sm:$0xf0] %v225
        %236 = vst [vmem:[%s187 + $0x10] sm:$0xff] %v227
        %237 = vst [vmem:[%s187 + $0x18] sm:$0xff] %v229
        %s238 = sand.u32 %s94, 1
        %s239 = scalar_lea.sflag [#allocation3], %s238
        %s240 = sand.u32 %s94, 1
        %s241 = smul.addr %s240, 32
        %s242 = scalar_lea.vmem [#allocation2], %s241
        // Predicated region
        $region29: #{tpu_custom_call.1} parent=27 // pred_check
          %p243 = pneg %p104
        $region30: #{tpu_custom_call.1} parent=27 // pred_check_branch
          %245 = sbr.rel (%p243) target = $region32
        $region31: #{tpu_custom_call.1} parent=27 // pred_region
          %s246 = smul.u32 2, %s21
          %s248 = ssub.s32 512, 512
          %249 = vsyncadd %s239, %s248
          %s250 = smul.addr %s20, 4
          %s251 = sadd.s32 %s246, %s250
          %s252 = smul.addr %s251, 128
          %s253 = scalar_lea.hbm %s2, %s252
          %s254 = sshll.u32 %s242, 4
          %s255 = int_to_ptr.vmem [resolvable:$true] %s254
          %260 = dma.vmem_to_hbm [thread:$0]  %s255, 512, %s253, %s239, 256, 256, 16
        $region32: #{tpu_custom_call.1} parent=27 // pred_fallthru
          _
      $region28: #{tpu_custom_call.1} parent=5 // pred_fallthru
        _
      %p261 = scmp.le.s32.totalorder 2, %s11
      // Predicated region
      $region33: #{tpu_custom_call.1} parent=5 // pred_check
        %p262 = pneg %p261
      $region34: #{tpu_custom_call.1} parent=5 // pred_check_branch
        %264 = sbr.rel (%p262) target = $region36
      $region35: #{tpu_custom_call.1} parent=5 // pred_region
        %s265 = ssub.s32 %s11, 2
        // Predicated region
        $region37: #{tpu_custom_call.1} parent=35 // pred_check
          %p266 = pneg %p110
        $region38: #{tpu_custom_call.1} parent=35 // pred_check_branch
          %268 = sbr.rel (%p266) target = $region40
        $region39: #{tpu_custom_call.1} parent=35 // pred_region
          %s269 = sand.u32 %s95, 1
          %s270 = scalar_lea.sflag [#allocation3], %s269
          %s271 = sand.u32 %s95, 1
          %s272 = smul.addr %s271, 32
          %s273 = scalar_lea.vmem [#allocation2], %s272
          %274 = dma.done %s270, 512
        $region40: #{tpu_custom_call.1} parent=35 // pred_fallthru
          _
      $region36: #{tpu_custom_call.1} parent=5 // pred_fallthru
        _
    $region6: #{tpu_custom_call.1} parent=1 // loop_footer
      %s15 = sadd.s32 1, %s11
    $region7: #{tpu_custom_call.1} parent=1 // loop_footer_branch
      %10 = sbr.rel target = $region3
    $region8: #{tpu_custom_call.1} parent=1 // loop_exit
      _
    %275 = vsyncpa [#allocation3], 1
    %s276 = scalar_lea.sflag [#allocation3], 1
    %277 = vsyncpa %s276, 1

</llo_original>
